<compile_context>
chip_gen: v7x
topology: tpu7x:2x2x1
jax: 0.10.0
libtpu: 0.0.40
codegen_flags: <defaults>
</compile_context>

<pallas_src>
import jax
import jax.numpy as jnp
from jax.experimental import pallas as pl
from jax.experimental.pallas import tpu as pltpu


def _copy_kernel(x_ref, o_ref):
    # Straight vld/vst copy of a lane-dense 2D tile.  No reshape in-kernel.
    o_ref[...] = x_ref[...]


def flatten_spatial(x):
    """Pallas equivalent of torch.nn.Flatten(start_dim=2, end_dim=3) on NCHW."""
    n, c, h, w = x.shape
    rows, cols = n * c, h * w

    # Metadata-only reshape in the wrapper (free in XLA for contiguous NCHW).
    x2d = x.reshape(rows, cols)
    itemsize = jnp.dtype(x.dtype).itemsize

    if rows % 8 == 0 and cols % 128 == 0:
        # Aligned case: lane-dense blocks, ~2 MiB per block.  With in+out
        # double-buffering this stays well under the 16 MiB default scoped
        # VMEM on v5e (and trivially under v6e/v7x limits) while being large
        # enough to amortize the ~0.35 us per-grid-step overhead.
        target_bytes = 2 * 1024 * 1024
        bc = cols  # keep full rows -> output lane dim is a multiple of 128
        br = max(8, min(rows, (target_bytes // (bc * itemsize)) // 8 * 8))
        while rows % br != 0:  # keep blocks evenly dividing (no masked stores)
            br -= 8
        grid = (rows // br,)
        in_spec = pl.BlockSpec((br, bc), lambda i: (i, 0))
        out_spec = pl.BlockSpec((br, bc), lambda i: (i, 0))
    else:
        # Irregular small shapes (e.g. the original (1,4,5,2) input): use the
        # full-array block, which is exempt from the (8,128) constraint.
        grid = (1,)
        in_spec = pl.BlockSpec((rows, cols), lambda i: (0, 0))
        out_spec = pl.BlockSpec((rows, cols), lambda i: (0, 0))

    out2d = pl.pallas_call(
        _copy_kernel,
        out_shape=jax.ShapeDtypeStruct((rows, cols), x.dtype),
        grid_spec=pltpu.PrefetchScalarGridSpec(
            num_scalar_prefetch=0,
            grid=grid,
            in_specs=[in_spec],
            out_specs=out_spec,
        ),
        compiler_params=pltpu.CompilerParams(
            dimension_semantics=("parallel",),
        ),
    )(x2d)

    # Final metadata-only reshape back to (N, C, H*W).
    return out2d.reshape(n, c, cols)


if __name__ == "__main__":
    key = jax.random.PRNGKey(0)

    # Primary test: aligned shapes (lane-dense fast path).
    x1 = jax.random.normal(key, (2, 4, 16, 16), dtype=jnp.float32)
    out = flatten_spatial(x1)
    jax.block_until_ready(out)
    ref = x1.reshape(x1.shape[0], x1.shape[1], -1)
    assert out.shape == (2, 4, 256)
    assert jnp.allclose(out, ref)

    # Secondary test: the module's original irregular shape (fallback path).
    x2 = jax.random.normal(jax.random.PRNGKey(1), (1, 4, 5, 2), dtype=jnp.float32)
    out2 = flatten_spatial(x2)
    jax.block_until_ready(out2)
    ref2 = x2.reshape(1, 4, -1)
    assert out2.shape == (1, 4, 10)
    assert jnp.allclose(out2, ref2)

    print("KERNEL_OK")
</pallas_src>

<mosaic_0001>
module attributes {stable_mosaic.version = 11 : i64} {
  func.func @_copy_kernel(%arg0: i32, %arg1: memref<8x256xf32, #tpu.memory_space<vmem>>, %arg2: memref<8x256xf32, #tpu.memory_space<vmem>>) attributes {dimension_semantics = [#tpu.dimension_semantics<parallel>], iteration_bounds = array<i64: 1>, scalar_prefetch = 0 : i64, scratch_operands = 0 : i64, tpu.core_type = #tpu.core_type<tc>, window_params = [{transform_indices = @transform_0, window_bounds = array<i64: 8, 256>}, {transform_indices = @transform_1, window_bounds = array<i64: 8, 256>}]} {
    %c0 = arith.constant 0 : index
    %c0_0 = arith.constant 0 : index
    %0 = vector.load %arg1[%c0, %c0_0] : memref<8x256xf32, #tpu.memory_space<vmem>>, vector<8x256xf32>
    %c0_1 = arith.constant 0 : index
    %c0_2 = arith.constant 0 : index
    %1 = vector.load %arg2[%c0_1, %c0_2] : memref<8x256xf32, #tpu.memory_space<vmem>>, vector<8x256xf32>
    tpu.vector_store %arg2[%c0_1, %c0_2], %0 {strides = array<i32>} : memref<8x256xf32, #tpu.memory_space<vmem>>, vector<8x256xf32>,
    return
  }
  func.func @transform_0(%arg0: i32) -> (i32, i32) {
    %c0_i32 = arith.constant 0 : i32
    %c0_i32_0 = arith.constant 0 : i32
    return %arg0, %c0_i32 : i32, i32
  }
  func.func @transform_1(%arg0: i32) -> (i32, i32) {
    %c0_i32 = arith.constant 0 : i32
    %c0_i32_0 = arith.constant 0 : i32
    return %arg0, %c0_i32 : i32, i32
  }
}

</mosaic_0001>

<llo_original>
// kernel: tpu_custom_call.1
$region0: #{tpu_custom_call.1}
  #allocation0 [shape = 'u32[]', space=smem, size = 0x4, offset = 0x4, fixed_abs, tag = 'smem constant byte address 0x4 - core index']
  #allocation1 [shape = 'u32[144,128]{1,0:T(1,128)}', space=vmem, size = 0x12000, scoped, tag = 'internal scratch']
  %s0 = inlined_call_operand.hbm [shape: f32[8,256], index: 0, kind: input, shape index: {}]
  %s1 = inlined_call_operand.hbm [shape: f32[8,256], index: 1, kind: output, shape index: {}]
  %s2 = sld [smem:[#allocation0]]
  $region18: #{tpu_custom_call.1} parent=0
    _
  %s4 = ssub.s32 1, %s2
  %s5 = scalar_select 0, %s4, %s2
  $region1: #{tpu_custom_call.1} parent=0
    #allocation2 [shape = 'u8[8192]{0}', space=vmem, size = 0x2000, scoped, tag = 'input window, operand 0, single buffered']
    #allocation3 [shape = 's32[1]{0}', space=sflag, size = 0x4, scoped, tag = 'scoped memory for tpu_custom_call.1']
    #allocation4 [shape = 's32[1]{0}', space=sflag, size = 0x4, scoped, tag = 'scoped memory for tpu_custom_call.1']
    #allocation5 [shape = 'u8[8192]{0}', space=vmem, size = 0x2000, scoped, tag = 'output window, operand 0, single buffered']
    %6 = vsyncpa [#allocation3], 0
    %7 = vsyncpa [#allocation4], 0
    // Predicated region
    $region2: #{tpu_custom_call.1} parent=1 // pred_check
      _
    $region3: #{tpu_custom_call.1} parent=1 // pred_check_branch
      %9 = sbr.rel (0) target = $region5
    $region4: #{tpu_custom_call.1} parent=1 // pred_region
      %s11 = ssub.s32 256, 256
      %12 = vsyncadd [#allocation3], %s11
      %s14 = sshll.u32 [#allocation2], 4
      %s15 = int_to_ptr.vmem [resolvable:$true] %s14
      %17 = dma.hbm_to_vmem [thread:$0]  %s0, 256, %s15, [#allocation3]
    $region5: #{tpu_custom_call.1} parent=1 // pred_fallthru
      _
    // Predicated region
    $region6: #{tpu_custom_call.1} parent=1 // pred_check
      _
    $region7: #{tpu_custom_call.1} parent=1 // pred_check_branch
      %19 = sbr.rel (0) target = $region9
    $region8: #{tpu_custom_call.1} parent=1 // pred_region
      %20 = dma.done [#allocation3], 256
    $region9: #{tpu_custom_call.1} parent=1 // pred_fallthru
      _
    %v21 = vld [vmem:[#allocation2] sm:$0xff]
    %v22 = vld [vmem:[#allocation2 + $0x8] sm:$0xff]
    %23 = vst [vmem:[#allocation5] sm:$0xff] %v21
    %24 = vst [vmem:[#allocation5 + $0x8] sm:$0xff] %v22
    // Predicated region
    $region10: #{tpu_custom_call.1} parent=1 // pred_check
      _
    $region11: #{tpu_custom_call.1} parent=1 // pred_check_branch
      %26 = sbr.rel (0) target = $region13
    $region12: #{tpu_custom_call.1} parent=1 // pred_region
      %s28 = ssub.s32 256, 256
      %29 = vsyncadd [#allocation4], %s28
      %s31 = sshll.u32 [#allocation5], 4
      %s32 = int_to_ptr.vmem [resolvable:$true] %s31
      %34 = dma.vmem_to_hbm [thread:$0]  %s32, 256, %s1, [#allocation4]
    $region13: #{tpu_custom_call.1} parent=1 // pred_fallthru
      _
    // Predicated region
    $region14: #{tpu_custom_call.1} parent=1 // pred_check
      _
    $region15: #{tpu_custom_call.1} parent=1 // pred_check_branch
      %36 = sbr.rel (0) target = $region17
    $region16: #{tpu_custom_call.1} parent=1 // pred_region
      %37 = dma.done [#allocation4], 256
    $region17: #{tpu_custom_call.1} parent=1 // pred_fallthru
      _
    %38 = vsyncpa [#allocation3], 1
    %39 = vsyncpa [#allocation4], 1

</llo_original>
